<compile_context>
chip_gen: v7x
topology: tpu7x:2x2x1
jax: 0.10.0
libtpu: 0.0.40
codegen_flags: <defaults>
</compile_context>

<pallas_src>
import functools

import jax
import jax.numpy as jnp
from jax import lax
from jax.experimental import pallas as pl
from jax.experimental.pallas import tpu as pltpu

EPS = 1e-6  # matches nn.CosineSimilarity(dim=1, eps=1e-06) in the module


# --------------------------------------------------------------------------- #
# Kernel
# --------------------------------------------------------------------------- #
def _focus_loss_kernel(v1_ref, v2_ref, out_ref, *,
                       total_rows, block_rows, mask_tail):
    """Writes the partial sum of cosine similarities for this row-block."""
    v1 = v1_ref[...].astype(jnp.float32)          # (TB, D)
    v2 = v2_ref[...].astype(jnp.float32)          # (TB, D)

    # Per-row dot product and squared L2 norms (lane-axis reduce, kept 2D).
    dot = jnp.sum(v1 * v2, axis=1, keepdims=True)     # (TB, 1)
    n1sq = jnp.sum(v1 * v1, axis=1, keepdims=True)    # (TB, 1)
    n2sq = jnp.sum(v2 * v2, axis=1, keepdims=True)    # (TB, 1)

    # rsqrt(max(n1sq*n2sq, eps^2)) == 1 / max(||v1||*||v2||, eps); runs on EUP.
    # NOTE: n1sq*n2sq can overflow f32 only for per-row norms ~1e19 (unrealistic
    # for activations); matches PyTorch's documented/ATen eps semantics.
    cos = dot * lax.rsqrt(jnp.maximum(n1sq * n2sq, jnp.float32(EPS * EPS)))

    if mask_tail:
        pid = pl.program_id(0)
        last = pl.num_programs(0) - 1

        @pl.when(pid == last)
        def _tail():
            # Zero out padded (OOB) rows of the final tile before reducing.
            row = pid * block_rows + lax.broadcasted_iota(jnp.int32, cos.shape, 0)
            masked = jnp.where(row < total_rows, cos, jnp.float32(0.0))
            out_ref[...] = jnp.sum(masked, axis=0, keepdims=True)

        @pl.when(pid != last)
        def _body():
            out_ref[...] = jnp.sum(cos, axis=0, keepdims=True)
    else:
        out_ref[...] = jnp.sum(cos, axis=0, keepdims=True)


# --------------------------------------------------------------------------- #
# Tiling / wrapper
# --------------------------------------------------------------------------- #
def _choose_block_rows(batch: int, feat: int, itemsize: int) -> int:
    """~4 MiB per input tile (2 inputs x 2 pipeline buffers ~= 16 MiB VMEM,
    covered by an explicit vmem_limit), rounded to the dtype's sublane packing
    granularity (8 rows for 4-byte, 16 for 2-byte, 32 for 1-byte dtypes)."""
    target_bytes = 4 << 20
    gran = max(8, 32 // max(1, itemsize))          # 8 / 16 / 32 rows
    row_bytes = max(1, feat * itemsize)
    tb = target_bytes // row_bytes
    tb = max(gran, min(8192, (tb // gran) * gran))
    b_pad = ((batch + gran - 1) // gran) * gran
    return int(min(tb, b_pad))


def _focus_loss_reference(v1: jax.Array, v2: jax.Array) -> jax.Array:
    """Plain-JAX path (also used as small-input fallback)."""
    v1 = v1.astype(jnp.float32)
    v2 = v2.astype(jnp.float32)
    dot = jnp.sum(v1 * v2, axis=1)
    nsq = jnp.sum(v1 * v1, axis=1) * jnp.sum(v2 * v2, axis=1)
    cos = dot * lax.rsqrt(jnp.maximum(nsq, jnp.float32(EPS * EPS)))
    return jnp.float32(1.0) - jnp.mean(cos)


def focus_loss(vector1: jax.Array, vector2: jax.Array, *,
               block_rows: int | None = None) -> jax.Array:
    """Pallas implementation of FocusLoss.forward (returns a scalar)."""
    assert vector1.shape == vector2.shape and vector1.ndim == 2
    B, D = vector1.shape
    itemsize = jnp.dtype(vector1.dtype).itemsize

    # Small-feature fallback: with D < 128 each DMA row / vreg uses only D of
    # 128 lanes and fixed kernel overhead dominates; XLA wins in this regime.
    if D < 128:
        return _focus_loss_reference(vector1, vector2)

    tb = block_rows if block_rows is not None else _choose_block_rows(B, D, itemsize)
    num_blocks = int(pl.cdiv(B, tb))
    mask_tail = (B % tb != 0) or (tb > B)

    kernel = functools.partial(
        _focus_loss_kernel,
        total_rows=B,
        block_rows=tb,
        mask_tail=mask_tail,
    )

    # 2 inputs x 2 pipeline buffers x tile + headroom; capped under v7x's
    # 64 MiB physical VMEM per TensorCore.
    tile_bytes = tb * D * itemsize
    vmem_limit = int(min(48 << 20, 2 * 2 * tile_bytes + (8 << 20)))

    cost = pl.CostEstimate(
        flops=6 * B * D + 10 * B,                 # 3 mul + 3 add per element + epilogue
        transcendentals=B,                        # one rsqrt per row
        bytes_accessed=2 * B * D * itemsize + 4 * num_blocks,
    )

    partials = pl.pallas_call(
        kernel,
        out_shape=jax.ShapeDtypeStruct((num_blocks, 1), jnp.float32),
        grid=(num_blocks,),
        in_specs=[
            pl.BlockSpec((tb, D), lambda i: (i, 0)),
            pl.BlockSpec((tb, D), lambda i: (i, 0)),
        ],
        # One partial sum per grid step -> no shared accumulator, so the grid
        # axis can be "parallel" (both TensorCores on v7x stream HBM).
        out_specs=pl.BlockSpec((1, 1), lambda i: (i, 0)),
        compiler_params=pltpu.CompilerParams(
            dimension_semantics=("parallel",),
            vmem_limit_bytes=vmem_limit,
        ),
        cost_estimate=cost,
    )(vector1, vector2)

    return jnp.float32(1.0) - jnp.sum(partials) / jnp.float32(B)


# --------------------------------------------------------------------------- #
# Demo / self-check
# --------------------------------------------------------------------------- #
if __name__ == "__main__":
    key = jax.random.PRNGKey(0)

    def torch_style_ref(v1, v2):
        # Semi-independent reference mirroring nn.CosineSimilarity(dim=1, eps=1e-6).
        dot = jnp.sum(v1 * v2, axis=1)
        denom = jnp.maximum(
            jnp.linalg.norm(v1, axis=1) * jnp.linalg.norm(v2, axis=1), EPS
        )
        return 1.0 - jnp.mean(dot / denom)

    ok = True

    # 1) Main Pallas path: small (batch, hidden) consistent with the module.
    k1, k2, k3, k4, k5, k6 = jax.random.split(key, 6)
    B, D = 16, 256
    v1 = jax.random.normal(k1, (B, D), dtype=jnp.float32)
    v2 = jax.random.normal(k2, (B, D), dtype=jnp.float32)
    loss = jax.block_until_ready(focus_loss(v1, v2))
    ok &= bool(jnp.allclose(loss, torch_style_ref(v1, v2), atol=1e-5, rtol=1e-5))

    # 2) Tail-masked, multi-block Pallas path (forced small block for coverage).
    Bt, Dt = 40, 128
    v1t = jax.random.normal(k3, (Bt, Dt), dtype=jnp.float32)
    v2t = jax.random.normal(k4, (Bt, Dt), dtype=jnp.float32)
    loss_t = jax.block_until_ready(focus_loss(v1t, v2t, block_rows=16))
    ok &= bool(jnp.allclose(loss_t, torch_style_ref(v1t, v2t), atol=1e-5, rtol=1e-5))

    # 3) Small-feature fallback path (D < 128 -> plain jnp).
    Bs, Ds = 8, 32
    v1s = jax.random.normal(k5, (Bs, Ds), dtype=jnp.float32)
    v2s = jax.random.normal(k6, (Bs, Ds), dtype=jnp.float32)
    loss_s = jax.block_until_ready(focus_loss(v1s, v2s))
    ok &= bool(jnp.allclose(loss_s, torch_style_ref(v1s, v2s), atol=1e-5, rtol=1e-5))

    assert ok, (loss, loss_t, loss_s)
    print("KERNEL_OK")
</pallas_src>

<mosaic_0001>
module attributes {stable_mosaic.version = 11 : i64} {
  func.func @_focus_loss_kernel(%arg0: i32, %arg1: memref<16x256xf32, #tpu.memory_space<vmem>>, %arg2: memref<16x256xf32, #tpu.memory_space<vmem>>, %arg3: memref<1x1xf32, #tpu.memory_space<vmem>>) attributes {dimension_semantics = [#tpu.dimension_semantics<parallel>], iteration_bounds = array<i64: 1>, scalar_prefetch = 0 : i64, scratch_operands = 0 : i64, tpu.core_type = #tpu.core_type<tc>, window_params = [{transform_indices = @transform_0, window_bounds = array<i64: 16, 256>}, {transform_indices = @transform_1, window_bounds = array<i64: 16, 256>}, {transform_indices = @transform_2, window_bounds = array<i64: 1, 1>}]} {
    %c0 = arith.constant 0 : index
    %c0_0 = arith.constant 0 : index
    %0 = vector.load %arg1[%c0, %c0_0] : memref<16x256xf32, #tpu.memory_space<vmem>>, vector<16x256xf32>
    %c0_1 = arith.constant 0 : index
    %c0_2 = arith.constant 0 : index
    %1 = vector.load %arg2[%c0_1, %c0_2] : memref<16x256xf32, #tpu.memory_space<vmem>>, vector<16x256xf32>
    %2 = arith.mulf %0, %1 : vector<16x256xf32>
    %cst = arith.constant dense<0.000000e+00> : vector<16xf32>
    %3 = vector.multi_reduction <add>, %2, %cst [1] : vector<16x256xf32> to vector<16xf32>
    %4 = vector.shape_cast %3 : vector<16xf32> to vector<16x1xf32>
    %5 = arith.mulf %0, %0 : vector<16x256xf32>
    %cst_3 = arith.constant dense<0.000000e+00> : vector<16xf32>
    %6 = vector.multi_reduction <add>, %5, %cst_3 [1] : vector<16x256xf32> to vector<16xf32>
    %7 = vector.shape_cast %6 : vector<16xf32> to vector<16x1xf32>
    %8 = arith.mulf %1, %1 : vector<16x256xf32>
    %cst_4 = arith.constant dense<0.000000e+00> : vector<16xf32>
    %9 = vector.multi_reduction <add>, %8, %cst_4 [1] : vector<16x256xf32> to vector<16xf32>
    %10 = vector.shape_cast %9 : vector<16xf32> to vector<16x1xf32>
    %11 = arith.mulf %7, %10 : vector<16x1xf32>
    %cst_5 = arith.constant 9.99999996E-13 : f32
    %12 = vector.broadcast %cst_5 : f32 to vector<16x1xf32>
    %13 = arith.maximumf %11, %12 : vector<16x1xf32>
    %14 = math.rsqrt %13 : vector<16x1xf32>
    %15 = arith.mulf %4, %14 : vector<16x1xf32>
    %cst_6 = arith.constant dense<0.000000e+00> : vector<1xf32>
    %16 = vector.multi_reduction <add>, %15, %cst_6 [0] : vector<16x1xf32> to vector<1xf32>
    %17 = vector.shape_cast %16 : vector<1xf32> to vector<1x1xf32>
    %c0_7 = arith.constant 0 : index
    %c0_8 = arith.constant 0 : index
    %18 = vector.load %arg3[%c0_7, %c0_8] : memref<1x1xf32, #tpu.memory_space<vmem>>, vector<1x1xf32>
    tpu.vector_store %arg3[%c0_7, %c0_8], %17 {strides = array<i32>} : memref<1x1xf32, #tpu.memory_space<vmem>>, vector<1x1xf32>,
    return
  }
  func.func @transform_0(%arg0: i32) -> (i32, i32) {
    %c0_i32 = arith.constant 0 : i32
    %c0_i32_0 = arith.constant 0 : i32
    return %arg0, %c0_i32 : i32, i32
  }
  func.func @transform_1(%arg0: i32) -> (i32, i32) {
    %c0_i32 = arith.constant 0 : i32
    %c0_i32_0 = arith.constant 0 : i32
    return %arg0, %c0_i32 : i32, i32
  }
  func.func @transform_2(%arg0: i32) -> (i32, i32) {
    %c0_i32 = arith.constant 0 : i32
    %c0_i32_0 = arith.constant 0 : i32
    return %arg0, %c0_i32 : i32, i32
  }
}

</mosaic_0001>

<llo_original>
// kernel: tpu_custom_call.1
$region0: #{tpu_custom_call.1}
  #allocation0 [shape = 'u32[]', space=smem, size = 0x4, offset = 0x4, fixed_abs, tag = 'smem constant byte address 0x4 - core index']
  #allocation1 [shape = 'u32[144,128]{1,0:T(1,128)}', space=vmem, size = 0x12000, scoped, tag = 'internal scratch']
  %s0 = inlined_call_operand.hbm [shape: f32[16,256], index: 0, kind: input, shape index: {}]
  %s1 = inlined_call_operand.hbm [shape: f32[16,256], index: 1, kind: input, shape index: {}]
  %s2 = inlined_call_operand.hbm [shape: f32[1,1], index: 2, kind: output, shape index: {}]
  %s3 = sld [smem:[#allocation0]]
  $region26: #{tpu_custom_call.1} parent=0
    _
  %s5 = ssub.s32 1, %s3
  %s6 = scalar_select 0, %s5, %s3
  $region1: #{tpu_custom_call.1} parent=0
    #allocation2 [shape = 'u8[16384]{0}', space=vmem, size = 0x4000, scoped, tag = 'input window, operand 0, single buffered']
    #allocation3 [shape = 's32[1]{0}', space=sflag, size = 0x4, scoped, tag = 'scoped memory for tpu_custom_call.1']
    #allocation4 [shape = 's32[1]{0}', space=sflag, size = 0x4, scoped, tag = 'scoped memory for tpu_custom_call.1']
    #allocation5 [shape = 'u8[16384]{0}', space=vmem, size = 0x4000, scoped, tag = 'input window, operand 1, single buffered']
    #allocation6 [shape = 's32[1]{0}', space=sflag, size = 0x4, scoped, tag = 'scoped memory for tpu_custom_call.1']
    #allocation7 [shape = 'u8[512]{0}', space=vmem, size = 0x400, scoped, tag = 'output window, operand 0, single buffered']
    %7 = vsyncpa [#allocation3], 0
    %8 = vsyncpa [#allocation6], 0
    %9 = vsyncpa [#allocation4], 0
    // Predicated region
    $region2: #{tpu_custom_call.1} parent=1 // pred_check
      _
    $region3: #{tpu_custom_call.1} parent=1 // pred_check_branch
      %11 = sbr.rel (0) target = $region5
    $region4: #{tpu_custom_call.1} parent=1 // pred_region
      %s13 = ssub.s32 512, 512
      %14 = vsyncadd [#allocation3], %s13
      %s15 = sshll.u32 [#allocation2], 4
      %s16 = int_to_ptr.vmem [resolvable:$true] %s15
      %21 = dma.hbm_to_vmem [thread:$0]  %s0, 512, %s16, [#allocation3], 256, 256, 16
    $region5: #{tpu_custom_call.1} parent=1 // pred_fallthru
      _
    // Predicated region
    $region6: #{tpu_custom_call.1} parent=1 // pred_check
      _
    $region7: #{tpu_custom_call.1} parent=1 // pred_check_branch
      %23 = sbr.rel (0) target = $region9
    $region8: #{tpu_custom_call.1} parent=1 // pred_region
      %s25 = ssub.s32 512, 512
      %26 = vsyncadd [#allocation6], %s25
      %s27 = sshll.u32 [#allocation5], 4
      %s28 = int_to_ptr.vmem [resolvable:$true] %s27
      %33 = dma.hbm_to_vmem [thread:$0]  %s1, 512, %s28, [#allocation6], 256, 256, 16
    $region9: #{tpu_custom_call.1} parent=1 // pred_fallthru
      _
    // Predicated region
    $region10: #{tpu_custom_call.1} parent=1 // pred_check
      _
    $region11: #{tpu_custom_call.1} parent=1 // pred_check_branch
      %35 = sbr.rel (0) target = $region13
    $region12: #{tpu_custom_call.1} parent=1 // pred_region
      %36 = dma.done [#allocation3], 512
    $region13: #{tpu_custom_call.1} parent=1 // pred_fallthru
      _
    // Predicated region
    $region14: #{tpu_custom_call.1} parent=1 // pred_check
      _
    $region15: #{tpu_custom_call.1} parent=1 // pred_check_branch
      %38 = sbr.rel (0) target = $region17
    $region16: #{tpu_custom_call.1} parent=1 // pred_region
      %39 = dma.done [#allocation6], 512
    $region17: #{tpu_custom_call.1} parent=1 // pred_fallthru
      _
    %v40 = vld [vmem:[#allocation2] sm:$0xff]
    %v41 = vld [vmem:[#allocation2 + $0x8] sm:$0xff]
    %v42 = vld [vmem:[#allocation2 + $0x10] sm:$0xff]
    %v43 = vld [vmem:[#allocation2 + $0x18] sm:$0xff]
    %v44 = vld [vmem:[#allocation5] sm:$0xff]
    %v45 = vld [vmem:[#allocation5 + $0x8] sm:$0xff]
    %v46 = vld [vmem:[#allocation5 + $0x10] sm:$0xff]
    %v47 = vld [vmem:[#allocation5 + $0x18] sm:$0xff]
    %v48 = vmul.f32 %v40, %v44
    %v49 = vmul.f32 %v41, %v45
    %v50 = vmul.f32 %v42, %v46
    %v51 = vmul.f32 %v43, %v47
    %v52 = vadd.f32 %v48, %v49
    %53 = vadd.xlane.f32.xlu0 %v52
    %v54 = vpop.xlane.xlu0 %53
    %v55 = vadd.f32 %v50, %v51
    %56 = vadd.xlane.f32.xlu0 %v55
    %v57 = vpop.xlane.xlu0 %56
    %v58 = vmul.f32 %v40, %v40
    %v59 = vmul.f32 %v41, %v41
    %v60 = vmul.f32 %v42, %v42
    %v61 = vmul.f32 %v43, %v43
    %v62 = vadd.f32 %v58, %v59
    %63 = vadd.xlane.f32.xlu0 %v62
    %v64 = vpop.xlane.xlu0 %63
    %v65 = vadd.f32 %v60, %v61
    %66 = vadd.xlane.f32.xlu0 %v65
    %v67 = vpop.xlane.xlu0 %66
    %v68 = vmul.f32 %v44, %v44
    %v69 = vmul.f32 %v45, %v45
    %v70 = vmul.f32 %v46, %v46
    %v71 = vmul.f32 %v47, %v47
    %v72 = vadd.f32 %v68, %v69
    %73 = vadd.xlane.f32.xlu0 %v72
    %v74 = vpop.xlane.xlu0 %73
    %v75 = vadd.f32 %v70, %v71
    %76 = vadd.xlane.f32.xlu0 %v75
    %v77 = vpop.xlane.xlu0 %76
    %v78 = vmul.f32 %v64, %v74
    %v79 = vmul.f32 %v67, %v77
    %v80 = vmax.f32 %v78, 1e-12
    %v81 = vmax.f32 %v79, 1e-12
    %v82 = vrsqrt.pop %v80
    %v83 = vrsqrt.pop %v81
    %v84 = vmul.f32 %v54, %v82
    %v85 = vmul.f32 %v57, %v83
    %v86 = vadd.f32 %v84, %v85
    %v87 = vrot.slane %v86, 4
    %v88 = vadd.f32 %v86, %v87
    %v89 = vrot.slane %v88, 2
    %v90 = vadd.f32 %v88, %v89
    %v91 = vrot.slane %v90, 1
    %v92 = vadd.f32 %v90, %v91
    %vm93 = vcmask 0
    %94 = vst.msk [vmem:[#allocation7] sm:$0x1] %vm93, %v92
    // Predicated region
    $region18: #{tpu_custom_call.1} parent=1 // pred_check
      _
    $region19: #{tpu_custom_call.1} parent=1 // pred_check_branch
      %96 = sbr.rel (0) target = $region21
    $region20: #{tpu_custom_call.1} parent=1 // pred_region
      %s98 = ssub.s32 16, 16
      %99 = vsyncadd [#allocation4], %s98
      %s101 = sshll.u32 [#allocation7], 4
      %s102 = int_to_ptr.vmem [resolvable:$true] %s101
      %104 = dma.vmem_to_hbm [thread:$0]  %s102, 16, %s2, [#allocation4]
    $region21: #{tpu_custom_call.1} parent=1 // pred_fallthru
      _
    // Predicated region
    $region22: #{tpu_custom_call.1} parent=1 // pred_check
      _
    $region23: #{tpu_custom_call.1} parent=1 // pred_check_branch
      %106 = sbr.rel (0) target = $region25
    $region24: #{tpu_custom_call.1} parent=1 // pred_region
      %107 = dma.done [#allocation4], 16
    $region25: #{tpu_custom_call.1} parent=1 // pred_fallthru
      _
    %108 = vsyncpa [#allocation3], 1
    %109 = vsyncpa [#allocation6], 1
    %110 = vsyncpa [#allocation4], 1

</llo_original>
